<compile_context>
chip_gen: v6e
topology: v6e:2x2x1
jax: 0.10.0
libtpu: 0.0.40
codegen_flags: <defaults>
</compile_context>

<pallas_src>
import functools

import jax
import jax.numpy as jnp
import numpy as np
from jax.experimental import pallas as pl
from jax.experimental.pallas import tpu as pltpu

_EPS = 1e-5
_LANE = 128


def _round_up(x, m):
    return (x + m - 1) // m * m


def _vmem_budget_bytes():
    """Generation-aware VMEM request: ~75% of physical, capped at 100 MiB.

    v5e/v6e (128 MiB physical) -> ~96 MiB; v7x (64 MiB physical) -> ~48 MiB.
    """
    try:
        cap = int(pltpu.get_tpu_info().vmem_capacity_bytes)
    except Exception:  # interpret mode / older runtime: conservative default
        cap = 64 << 20
    return max(16 << 20, min(int(0.75 * cap), 100 << 20))


def _pick_batch_tile(n, l, cp, vmem_limit):
    """Largest batch tile giving ~<=1024 rows/step, inside the VMEM budget,
    dividing N, and with (bt*L) % 8 == 0 so 2-D row blocks are (8,128)-legal."""
    per_row_bytes = 16 * cp * 4            # conservative in-kernel temp budget
    rows_cap = max(l, int(0.6 * vmem_limit) // per_row_bytes)
    limit = max(1, min(n, max(1, 1024 // l), max(1, rows_cap // l)))
    for bt in range(limit, 0, -1):
        if n % bt == 0 and (bt * l) % 8 == 0:
            return bt
    # Fallback: one block covering the whole array is always layout-legal.
    return n


# --------------------------- in-kernel helpers ------------------------------
def _conv3_rows(y, w_ref, L, cin):
    """3-tap conv along L as three accumulating MXU matmuls.

    y:     (R, cin) f32 rows; rows are a (batch_tile, L) block flattened
           row-major, channels live on the lane axis.
    w_ref: (3*cin, Cp) bf16 ref, rows ordered [tap0*cin, tap1*cin, tap2*cin].
    Returns (R, Cp) f32 (MXU accumulates in f32).
    """
    R = y.shape[0]
    zero_row = jnp.zeros((1, cin), jnp.float32)
    y_m1 = jnp.concatenate([zero_row, y[:-1, :]], axis=0)   # row r -> y[r-1]
    y_p1 = jnp.concatenate([y[1:, :], zero_row], axis=0)    # row r -> y[r+1]
    # Zero taps that crossed a sample boundary (cheap (R,1) mask on lanes).
    l_idx = jax.lax.broadcasted_iota(jnp.int32, (R, 1), 0) % L
    y_m1 = jnp.where(l_idx >= 1, y_m1, 0.0)
    y_p1 = jnp.where(l_idx <= L - 2, y_p1, 0.0)
    acc = jnp.dot(y_m1.astype(jnp.bfloat16), w_ref[0:cin, :],
                  preferred_element_type=jnp.float32)
    acc = acc + jnp.dot(y.astype(jnp.bfloat16), w_ref[cin:2 * cin, :],
                        preferred_element_type=jnp.float32)
    acc = acc + jnp.dot(y_p1.astype(jnp.bfloat16), w_ref[2 * cin:3 * cin, :],
                        preferred_element_type=jnp.float32)
    return acc


# ------------------------------- kernels ------------------------------------
def _conv1_stats_kernel(x_ref, w1_ref, s_ref, q_ref, *, L, cin):
    """Pass 1 (stats only): conv1 on one batch tile + BN1 sum / sum-of-squares."""
    @pl.when(pl.program_id(1) == 0)
    def _init():
        s_ref[...] = jnp.zeros_like(s_ref)
        q_ref[...] = jnp.zeros_like(q_ref)

    h = _conv3_rows(x_ref[...].astype(jnp.float32), w1_ref, L, cin)
    s_ref[...] += jnp.sum(h, axis=0, keepdims=True).reshape(1, 1, -1)
    q_ref[...] += jnp.sum(h * h, axis=0, keepdims=True).reshape(1, 1, -1)


def _conv1_bn1_relu_conv2_stats_kernel(x_ref, w1_ref, w2_ref, a1_ref, c1_ref,
                                       h2_ref, s_ref, q_ref, *, L, cin, cp):
    """Pass 2: recompute conv1, folded BN1 + ReLU, conv2, store h2 (bf16),
    accumulate BN2 sum / sum-of-squares."""
    @pl.when(pl.program_id(1) == 0)
    def _init():
        s_ref[...] = jnp.zeros_like(s_ref)
        q_ref[...] = jnp.zeros_like(q_ref)

    x = x_ref[...].astype(jnp.float32)
    h1 = _conv3_rows(x, w1_ref, L, cin)                       # (R, Cp)
    y = jnp.maximum(h1 * a1_ref[...] + c1_ref[...], 0.0)      # folded BN1+ReLU
    h2 = _conv3_rows(y, w2_ref, L, cp)                        # (R, Cp)
    h2_ref[...] = h2.astype(jnp.bfloat16)
    s_ref[...] += jnp.sum(h2, axis=0, keepdims=True).reshape(1, 1, -1)
    q_ref[...] += jnp.sum(h2 * h2, axis=0, keepdims=True).reshape(1, 1, -1)


def _bn2_residual_relu_kernel(h2_ref, a2_ref, c2_ref, x_ref, o_ref, *, cin):
    """Pass 3: folded BN2 + identity add + ReLU (pure elementwise, parallel)."""
    z = h2_ref[...].astype(jnp.float32) * a2_ref[...] + c2_ref[...]
    out = jnp.maximum(z[:, 0:cin] + x_ref[...].astype(jnp.float32), 0.0)
    o_ref[...] = out.astype(o_ref.dtype)


# ---------------------------- host-side helpers ------------------------------
def _im2col_weight(w, cin_pad, cout_pad):
    """(Cout, Cin, 3) -> (3*cin_pad, cout_pad) bf16; row = tap*cin_pad + cin."""
    c_out, c_in, _ = w.shape
    w_t = jnp.transpose(w, (2, 1, 0)).astype(jnp.float32)     # (3, Cin, Cout)
    w_t = jnp.pad(w_t, ((0, 0), (0, cin_pad - c_in), (0, cout_pad - c_out)))
    return w_t.reshape(3 * cin_pad, cout_pad).astype(jnp.bfloat16)


def _fold_bn(s, q, gamma, beta, count, cp):
    """Fold training-mode BN (biased var, eps=1e-5) into per-channel
    scale/shift; partial-stat rows (one per parallel split) are summed here."""
    s = s.reshape(-1, cp).sum(axis=0, keepdims=True)
    q = q.reshape(-1, cp).sum(axis=0, keepdims=True)
    c = gamma.shape[0]
    g = jnp.pad(gamma.astype(jnp.float32), (0, cp - c)).reshape(1, cp)
    b = jnp.pad(beta.astype(jnp.float32), (0, cp - c)).reshape(1, cp)
    mean = s / count
    var = jnp.maximum(q / count - mean * mean, 0.0)
    scale = g * jax.lax.rsqrt(var + _EPS)
    shift = b - mean * scale
    return scale, shift


# ------------------------------ public API -----------------------------------
def basic_block_forward_nlc(x_nlc, w1, g1, b1, w2, g2, b2, *, batch_tile=None):
    """Channels-last BasicBlock. x_nlc: (N, L, C) -> (N, L, C)."""
    N, L, C = x_nlc.shape
    Cp = _round_up(C, _LANE)
    count = float(N * L)                   # BN reduces over the full (N, L)
    vmem_limit = _vmem_budget_bytes()

    if batch_tile is None:
        batch_tile = _pick_batch_tile(N, L, Cp, vmem_limit)
    batch_tile = int(batch_tile)
    if N % batch_tile or ((batch_tile * L) % 8 and batch_tile != N):
        raise ValueError("batch_tile must divide N and give 8-aligned rows")
    R = batch_tile * L
    nb = N // batch_tile
    # Split the stats passes across 2 TensorCores (v7x) via a leading
    # "parallel" axis with per-split partial sums (harmless on 1-TC chips).
    S = 2 if (nb % 2 == 0 and nb >= 2) else 1
    nbps = nb // S

    x2d = x_nlc.reshape(N * L, C)          # free reshape, no channel padding
    w1m = _im2col_weight(w1, C, Cp)        # (3*C,  Cp) bf16
    w2m = _im2col_weight(w2, Cp, Cp)       # (3*Cp, Cp) bf16

    # ---- block specs ---------------------------------------------------------
    x_spec2 = pl.BlockSpec((R, C), lambda c, i: (c * nbps + i, 0))
    h2o_spec2 = pl.BlockSpec((R, Cp), lambda c, i: (c * nbps + i, 0))
    w1_spec2 = pl.BlockSpec((3 * C, Cp), lambda c, i: (0, 0))
    w2_spec2 = pl.BlockSpec((3 * Cp, Cp), lambda c, i: (0, 0))
    vec_spec2 = pl.BlockSpec((1, Cp), lambda c, i: (0, 0))
    stat_spec2 = pl.BlockSpec((1, 1, Cp), lambda c, i: (c, 0, 0))

    x_spec1 = pl.BlockSpec((R, C), lambda i: (i, 0))
    h2_spec1 = pl.BlockSpec((R, Cp), lambda i: (i, 0))
    vec_spec1 = pl.BlockSpec((1, Cp), lambda i: (0, 0))

    stats_params = pltpu.CompilerParams(
        dimension_semantics=("parallel", "arbitrary"),
        vmem_limit_bytes=vmem_limit)
    ew_params = pltpu.CompilerParams(
        dimension_semantics=("parallel",),
        vmem_limit_bytes=vmem_limit)

    stat_shape = jax.ShapeDtypeStruct((S, 1, Cp), jnp.float32)
    h2_shape = jax.ShapeDtypeStruct((N * L, Cp), jnp.bfloat16)

    p1_cost = pl.CostEstimate(
        flops=int(2 * N * L * 3 * C * Cp + 3 * N * L * Cp),
        transcendentals=0,
        bytes_accessed=int(N * L * C * 4 + 3 * C * Cp * 2 + 2 * S * Cp * 4))
    p2_cost = pl.CostEstimate(
        flops=int(2 * N * L * 3 * (C + Cp) * Cp + 8 * N * L * Cp),
        transcendentals=0,
        bytes_accessed=int(N * L * C * 4 + N * L * Cp * 2
                           + 3 * (C + Cp) * Cp * 2 + 2 * S * Cp * 4))
    p3_cost = pl.CostEstimate(
        flops=int(4 * N * L * Cp),
        transcendentals=0,
        bytes_accessed=int(N * L * Cp * 2 + 2 * N * L * C * 4))

    # ---- pass 1: conv1 + BN1 batch statistics (stats only) -------------------
    s1, q1 = pl.pallas_call(
        functools.partial(_conv1_stats_kernel, L=L, cin=C),
        grid=(S, nbps),
        in_specs=[x_spec2, w1_spec2],
        out_specs=[stat_spec2, stat_spec2],
        out_shape=[stat_shape, stat_shape],
        compiler_params=stats_params,
        cost_estimate=p1_cost,
    )(x2d, w1m)
    a1, c1 = _fold_bn(s1, q1, g1, b1, count, Cp)

    # ---- pass 2: conv1 recompute + folded BN1 + ReLU + conv2 + BN2 stats ------
    h2, s2, q2 = pl.pallas_call(
        functools.partial(_conv1_bn1_relu_conv2_stats_kernel,
                          L=L, cin=C, cp=Cp),
        grid=(S, nbps),
        in_specs=[x_spec2, w1_spec2, w2_spec2, vec_spec2, vec_spec2],
        out_specs=[h2o_spec2, stat_spec2, stat_spec2],
        out_shape=[h2_shape, stat_shape, stat_shape],
        compiler_params=stats_params,
        cost_estimate=p2_cost,
    )(x2d, w1m, w2m, a1, c1)
    a2, c2 = _fold_bn(s2, q2, g2, b2, count, Cp)

    # ---- pass 3: folded BN2 + residual + ReLU (parallel / megacore) -----------
    out2d = pl.pallas_call(
        functools.partial(_bn2_residual_relu_kernel, cin=C),
        grid=(nb,),
        in_specs=[h2_spec1, vec_spec1, vec_spec1, x_spec1],
        out_specs=x_spec1,
        out_shape=jax.ShapeDtypeStruct((N * L, C), x_nlc.dtype),
        compiler_params=ew_params,
        cost_estimate=p3_cost,
    )(h2, a2, c2, x2d)

    return out2d.reshape(N, L, C)


def basic_block_forward(x_ncl, w1, g1, b1, w2, g2, b2, *, batch_tile=None):
    """PyTorch-layout entry point: x_ncl (N, C, L); w* (Cout, Cin, 3); g*, b* (Cout,).

    Callers that already hold channels-last activations should use
    basic_block_forward_nlc directly and skip these two XLA-level transposes.
    """
    x_nlc = jnp.transpose(x_ncl, (0, 2, 1))                  # NCL -> NLC
    out_nlc = basic_block_forward_nlc(x_nlc, w1, g1, b1, w2, g2, b2,
                                      batch_tile=batch_tile)
    return jnp.transpose(out_nlc, (0, 2, 1))                 # NLC -> NCL


# ---------------- pure-JAX reference (for correctness check) ----------------
def _conv1d_ref(x_ncl, w, dtype):
    return jax.lax.conv_general_dilated(
        x_ncl.astype(dtype), w.astype(dtype), window_strides=(1,),
        padding=((1, 1),), dimension_numbers=("NCH", "OIH", "NCH"),
        preferred_element_type=jnp.float32)


def _bn_ref(y_ncl, g, b):
    mu = y_ncl.mean(axis=(0, 2), keepdims=True)
    var = ((y_ncl - mu) ** 2).mean(axis=(0, 2), keepdims=True)
    return (y_ncl - mu) / jnp.sqrt(var + _EPS) * g.reshape(1, -1, 1) \
        + b.reshape(1, -1, 1)


def _basic_block_ref(x_ncl, w1, g1, b1, w2, g2, b2, dtype=jnp.float32):
    out = jnp.maximum(_bn_ref(_conv1d_ref(x_ncl, w1, dtype), g1, b1), 0.0)
    out = _bn_ref(_conv1d_ref(out, w2, dtype), g2, b2)
    return jnp.maximum(out + x_ncl, 0.0)


if __name__ == "__main__":
    N, C, L = 2, 4, 16                     # inplanes = planes = 4, stride = 1
    key = jax.random.PRNGKey(0)
    kx, k1, k2, k3, k4, k5, k6 = jax.random.split(key, 7)

    x = jax.random.normal(kx, (N, C, L), dtype=jnp.float32)
    fan_in = C * 3
    w1 = jax.random.normal(k1, (C, C, 3), dtype=jnp.float32) / np.sqrt(fan_in)
    w2 = jax.random.normal(k2, (C, C, 3), dtype=jnp.float32) / np.sqrt(fan_in)
    g1 = 1.0 + 0.1 * jax.random.normal(k3, (C,), dtype=jnp.float32)
    b1 = 0.1 * jax.random.normal(k4, (C,), dtype=jnp.float32)
    g2 = 1.0 + 0.1 * jax.random.normal(k5, (C,), dtype=jnp.float32)
    b2 = 0.1 * jax.random.normal(k6, (C,), dtype=jnp.float32)

    out = basic_block_forward(x, w1, g1, b1, w2, g2, b2)
    out = jax.block_until_ready(out)
    out_np = np.asarray(out)

    # Check vs. a reference mirroring the kernel's bf16 MXU operands (f32
    # accumulation); the bf16 h2 intermediate adds ~1e-2-level absolute noise.
    ref_bf16 = np.asarray(_basic_block_ref(x, w1, g1, b1, w2, g2, b2,
                                           dtype=jnp.bfloat16))
    np.testing.assert_allclose(out_np, ref_bf16, rtol=2e-2, atol=2e-2)

    # Looser check vs. the pure-f32 reference (bf16 conv operands are a
    # deliberate MXU-throughput choice).
    ref_f32 = np.asarray(_basic_block_ref(x, w1, g1, b1, w2, g2, b2,
                                          dtype=jnp.float32))
    np.testing.assert_allclose(out_np, ref_f32, rtol=6e-2, atol=6e-2)

    print("KERNEL_OK")
</pallas_src>

<mosaic_0001>
module attributes {stable_mosaic.version = 11 : i64} {
  func.func @_conv1_stats_kernel(%arg0: i32, %arg1: i32, %arg2: memref<32x4xf32, #tpu.memory_space<vmem>>, %arg3: memref<12x128xbf16, #tpu.memory_space<vmem>>, %arg4: memref<1x1x128xf32, #tpu.memory_space<vmem>>, %arg5: memref<1x1x128xf32, #tpu.memory_space<vmem>>) attributes {dimension_semantics = [#tpu.dimension_semantics<parallel>, #tpu.dimension_semantics<arbitrary>], iteration_bounds = array<i64: 1, 1>, scalar_prefetch = 0 : i64, scratch_operands = 0 : i64, tpu.core_type = #tpu.core_type<tc>, window_params = [{transform_indices = @transform_0, window_bounds = array<i64: 32, 4>}, {pipeline_mode = #tpu.pipeline_mode<synchronous>, transform_indices = @transform_1, window_bounds = array<i64: 12, 128>}, {transform_indices = @transform_2, window_bounds = array<i64: 1, 1, 128>}, {transform_indices = @transform_3, window_bounds = array<i64: 1, 1, 128>}]} {
    %c0_i32 = arith.constant 0 : i32
    %0 = arith.cmpi eq, %arg1, %c0_i32 : i32
    %1 = arith.extui %0 : i1 to i32
    %c0_i32_0 = arith.constant 0 : i32
    %2 = arith.cmpi ne, %1, %c0_i32_0 : i32
    scf.if %2 {
      %cst_30 = arith.constant 0.000000e+00 : f32
      %62 = vector.broadcast %cst_30 : f32 to vector<1x1x128xf32>
      %c0_31 = arith.constant 0 : index
      %c0_32 = arith.constant 0 : index
      %c0_33 = arith.constant 0 : index
      %63 = vector.load %arg4[%c0_31, %c0_32, %c0_33] : memref<1x1x128xf32, #tpu.memory_space<vmem>>, vector<1x1x128xf32>
      tpu.vector_store %arg4[%c0_31, %c0_32, %c0_33], %62 {strides = array<i32>} : memref<1x1x128xf32, #tpu.memory_space<vmem>>, vector<1x1x128xf32>,
      %cst_34 = arith.constant 0.000000e+00 : f32
      %64 = vector.broadcast %cst_34 : f32 to vector<1x1x128xf32>
      %c0_35 = arith.constant 0 : index
      %c0_36 = arith.constant 0 : index
      %c0_37 = arith.constant 0 : index
      %65 = vector.load %arg5[%c0_35, %c0_36, %c0_37] : memref<1x1x128xf32, #tpu.memory_space<vmem>>, vector<1x1x128xf32>
      tpu.vector_store %arg5[%c0_35, %c0_36, %c0_37], %64 {strides = array<i32>} : memref<1x1x128xf32, #tpu.memory_space<vmem>>, vector<1x1x128xf32>,
    } else {
    }
    %c0 = arith.constant 0 : index
    %c0_1 = arith.constant 0 : index
    %3 = vector.load %arg2[%c0, %c0_1] : memref<32x4xf32, #tpu.memory_space<vmem>>, vector<32x4xf32>
    %cst = arith.constant 0.000000e+00 : f32
    %4 = vector.broadcast %cst : f32 to vector<1x4xf32>
    %5 = vector.extract_strided_slice %3 {offsets = [0, 0], sizes = [31, 4], strides = [1, 1]} : vector<32x4xf32> to vector<31x4xf32>
    %6 = tpu.concatenate %4, %5 in 0 : vector<1x4xf32>, vector<31x4xf32> -> vector<32x4xf32>
    %7 = vector.extract_strided_slice %3 {offsets = [1, 0], sizes = [31, 4], strides = [1, 1]} : vector<32x4xf32> to vector<31x4xf32>
    %8 = tpu.concatenate %7, %4 in 0 : vector<31x4xf32>, vector<1x4xf32> -> vector<32x4xf32>
    %9 = tpu.iota {dimensions = array<i32: 0>} : vector<32x1xi32>
    %c16_i32 = arith.constant 16 : i32
    %c0_i32_2 = arith.constant 0 : i32
    %10 = arith.cmpi eq, %c16_i32, %c0_i32_2 : i32
    %c1_i32 = arith.constant 1 : i32
    %11 = arith.select %10, %c1_i32, %c16_i32 : i32
    %12 = vector.broadcast %11 : i32 to vector<32x1xi32>
    %13 = arith.remsi %9, %12 : vector<32x1xi32>
    %c0_i32_3 = arith.constant 0 : i32
    %14 = vector.broadcast %c0_i32_3 : i32 to vector<32x1xi32>
    %15 = arith.cmpi ne, %13, %14 : vector<32x1xi32>
    %c0_i32_4 = arith.constant 0 : i32
    %16 = vector.broadcast %c0_i32_4 : i32 to vector<32x1xi32>
    %17 = arith.cmpi slt, %13, %16 : vector<32x1xi32>
    %c0_i32_5 = arith.constant 0 : i32
    %18 = arith.cmpi slt, %11, %c0_i32_5 : i32
    %19 = vector.broadcast %18 : i1 to vector<32x1xi1>
    %20 = vector.broadcast %19 : vector<32x1xi1> to vector<32x1xi1>
    %21 = arith.xori %17, %20 : vector<32x1xi1>
    %22 = arith.andi %21, %15 : vector<32x1xi1>
    %23 = vector.broadcast %11 : i32 to vector<32x1xi32>
    %24 = arith.addi %13, %23 : vector<32x1xi32>
    %25 = arith.select %22, %24, %13 : vector<32x1xi1>, vector<32x1xi32>
    %c1_i32_6 = arith.constant 1 : i32
    %26 = vector.broadcast %c1_i32_6 : i32 to vector<32x1xi32>
    %27 = arith.cmpi sge, %25, %26 : vector<32x1xi32>
    %cst_7 = arith.constant 0.000000e+00 : f32
    %28 = vector.shape_cast %27 : vector<32x1xi1> to vector<32x1xi1>
    %29 = vector.broadcast %28 : vector<32x1xi1> to vector<32x4xi1>
    %30 = vector.broadcast %cst_7 : f32 to vector<32x4xf32>
    %31 = arith.select %29, %6, %30 : vector<32x4xi1>, vector<32x4xf32>
    %c14_i32 = arith.constant 14 : i32
    %32 = vector.broadcast %c14_i32 : i32 to vector<32x1xi32>
    %33 = arith.cmpi sle, %25, %32 : vector<32x1xi32>
    %cst_8 = arith.constant 0.000000e+00 : f32
    %34 = vector.shape_cast %33 : vector<32x1xi1> to vector<32x1xi1>
    %35 = vector.broadcast %34 : vector<32x1xi1> to vector<32x4xi1>
    %36 = vector.broadcast %cst_8 : f32 to vector<32x4xf32>
    %37 = arith.select %35, %8, %36 : vector<32x4xi1>, vector<32x4xf32>
    %38 = arith.truncf %31 : vector<32x4xf32> to vector<32x4xbf16>
    %c0_9 = arith.constant 0 : index
    %c0_10 = arith.constant 0 : index
    %39 = vector.load %arg3[%c0_9, %c0_10] : memref<12x128xbf16, #tpu.memory_space<vmem>>, vector<4x128xbf16>
    %cst_11 = arith.constant dense<0.000000e+00> : vector<32x128xf32>
    %40 = tpu.matmul %38, %39, %cst_11 {dimension_numbers = #tpu.dot_dimension_numbers<[1], [0], [0], [1], [0, 0, 1, 1], [], []>} : vector<32x4xbf16>, vector<4x128xbf16>, vector<32x128xf32> -> vector<32x128xf32>
    %41 = arith.truncf %3 : vector<32x4xf32> to vector<32x4xbf16>
    %c4 = arith.constant 4 : index
    %c0_12 = arith.constant 0 : index
    %42 = vector.load %arg3[%c4, %c0_12] : memref<12x128xbf16, #tpu.memory_space<vmem>>, vector<4x128xbf16>
    %cst_13 = arith.constant dense<0.000000e+00> : vector<32x128xf32>
    %43 = tpu.matmul %41, %42, %cst_13 {dimension_numbers = #tpu.dot_dimension_numbers<[1], [0], [0], [1], [0, 0, 1, 1], [], []>} : vector<32x4xbf16>, vector<4x128xbf16>, vector<32x128xf32> -> vector<32x128xf32>
    %44 = arith.addf %40, %43 : vector<32x128xf32>
    %45 = arith.truncf %37 : vector<32x4xf32> to vector<32x4xbf16>
    %c8 = arith.constant 8 : index
    %c0_14 = arith.constant 0 : index
    %46 = vector.load %arg3[%c8, %c0_14] : memref<12x128xbf16, #tpu.memory_space<vmem>>, vector<4x128xbf16>
    %cst_15 = arith.constant dense<0.000000e+00> : vector<32x128xf32>
    %47 = tpu.matmul %45, %46, %cst_15 {dimension_numbers = #tpu.dot_dimension_numbers<[1], [0], [0], [1], [0, 0, 1, 1], [], []>} : vector<32x4xbf16>, vector<4x128xbf16>, vector<32x128xf32> -> vector<32x128xf32>
    %48 = arith.addf %44, %47 : vector<32x128xf32>
    %c0_16 = arith.constant 0 : index
    %c0_17 = arith.constant 0 : index
    %c0_18 = arith.constant 0 : index
    %49 = vector.load %arg4[%c0_16, %c0_17, %c0_18] : memref<1x1x128xf32, #tpu.memory_space<vmem>>, vector<1x1x128xf32>
    %cst_19 = arith.constant dense<0.000000e+00> : vector<128xf32>
    %50 = vector.multi_reduction <add>, %48, %cst_19 [0] : vector<32x128xf32> to vector<128xf32>
    %51 = vector.shape_cast %50 : vector<128xf32> to vector<1x128xf32>
    %52 = vector.shape_cast %51 : vector<1x128xf32> to vector<1x1x128xf32>
    %53 = arith.addf %49, %52 : vector<1x1x128xf32>
    %c0_20 = arith.constant 0 : index
    %c0_21 = arith.constant 0 : index
    %c0_22 = arith.constant 0 : index
    %54 = vector.load %arg4[%c0_20, %c0_21, %c0_22] : memref<1x1x128xf32, #tpu.memory_space<vmem>>, vector<1x1x128xf32>
    tpu.vector_store %arg4[%c0_20, %c0_21, %c0_22], %53 {strides = array<i32>} : memref<1x1x128xf32, #tpu.memory_space<vmem>>, vector<1x1x128xf32>,
    %c0_23 = arith.constant 0 : index
    %c0_24 = arith.constant 0 : index
    %c0_25 = arith.constant 0 : index
    %55 = vector.load %arg5[%c0_23, %c0_24, %c0_25] : memref<1x1x128xf32, #tpu.memory_space<vmem>>, vector<1x1x128xf32>
    %56 = arith.mulf %48, %48 : vector<32x128xf32>
    %cst_26 = arith.constant dense<0.000000e+00> : vector<128xf32>
    %57 = vector.multi_reduction <add>, %56, %cst_26 [0] : vector<32x128xf32> to vector<128xf32>
    %58 = vector.shape_cast %57 : vector<128xf32> to vector<1x128xf32>
    %59 = vector.shape_cast %58 : vector<1x128xf32> to vector<1x1x128xf32>
    %60 = arith.addf %55, %59 : vector<1x1x128xf32>
    %c0_27 = arith.constant 0 : index
    %c0_28 = arith.constant 0 : index
    %c0_29 = arith.constant 0 : index
    %61 = vector.load %arg5[%c0_27, %c0_28, %c0_29] : memref<1x1x128xf32, #tpu.memory_space<vmem>>, vector<1x1x128xf32>
    tpu.vector_store %arg5[%c0_27, %c0_28, %c0_29], %60 {strides = array<i32>} : memref<1x1x128xf32, #tpu.memory_space<vmem>>, vector<1x1x128xf32>,
    return
  }
  func.func @transform_0(%arg0: i32, %arg1: i32) -> (i32, i32) {
    %c1_i32 = arith.constant 1 : i32
    %0 = arith.muli %arg0, %c1_i32 : i32
    %1 = arith.addi %0, %arg1 : i32
    %c0_i32 = arith.constant 0 : i32
    %c0_i32_0 = arith.constant 0 : i32
    return %1, %c0_i32 : i32, i32
  }
  func.func @transform_1(%arg0: i32, %arg1: i32) -> (i32, i32) {
    %c0_i32 = arith.constant 0 : i32
    %c0_i32_0 = arith.constant 0 : i32
    %c0_i32_1 = arith.constant 0 : i32
    return %c0_i32, %c0_i32_0 : i32, i32
  }
  func.func @transform_2(%arg0: i32, %arg1: i32) -> (i32, i32, i32) {
    %c0_i32 = arith.constant 0 : i32
    %c0_i32_0 = arith.constant 0 : i32
    %c0_i32_1 = arith.constant 0 : i32
    return %arg0, %c0_i32, %c0_i32_0 : i32, i32, i32
  }
  func.func @transform_3(%arg0: i32, %arg1: i32) -> (i32, i32, i32) {
    %c0_i32 = arith.constant 0 : i32
    %c0_i32_0 = arith.constant 0 : i32
    %c0_i32_1 = arith.constant 0 : i32
    return %arg0, %c0_i32, %c0_i32_0 : i32, i32, i32
  }
}

</mosaic_0001>

<llo_original>
// kernel: tpu_custom_call.1
$region0: #{tpu_custom_call.1}
  #allocation0 [shape = 'u32[]', space=smem, size = 0x4, offset = 0x4, fixed_abs, tag = 'smem constant byte address 0x4 - core index']
  #allocation1 [shape = 'u32[144,128]{1,0:T(1,128)}', space=vmem, size = 0x12000, scoped, tag = 'internal scratch']
  %s0 = inlined_call_operand.vmem [shape: f32[32,4], index: 0, kind: input, shape index: {}]
  %s1 = inlined_call_operand.vmem [shape: bf16[12,128], index: 1, kind: input, shape index: {}]
  %s2 = inlined_call_operand.hbm [shape: f32[1,1,128], index: 2, kind: output, shape index: {0}]
  %s3 = inlined_call_operand.hbm [shape: f32[1,1,128], index: 3, kind: output, shape index: {1}]
  %4 = xla_tuple %s2, %s3
  %s5 = sld [smem:[#allocation0]]
  $region30: #{tpu_custom_call.1} parent=0
    _
  %s7 = ssub.s32 1, %s5
  %s8 = scalar_select 0, %s7, %s5
  $region1: #{tpu_custom_call.1} parent=0
    #allocation2 [shape = 'u8[512]{0}', space=vmem, size = 0x400, scoped, tag = 'output window, operand 0, single buffered']
    #allocation3 [shape = 's32[1]{0}', space=sflag, size = 0x4, scoped, tag = 'scoped memory for tpu_custom_call.1']
    #allocation4 [shape = 'u8[512]{0}', space=vmem, size = 0x400, scoped, tag = 'output window, operand 1, single buffered']
    #allocation5 [shape = 's32[1]{0}', space=sflag, size = 0x4, scoped, tag = 'scoped memory for tpu_custom_call.1']
    %9 = vsyncpa [#allocation3], 0
    %10 = vsyncpa [#allocation5], 0
    // Predicated region
    $region2: #{tpu_custom_call.1} parent=1 // pred_check
      _
    $region3: #{tpu_custom_call.1} parent=1 // pred_check_branch
      %12 = sbr.rel (0) target = $region5
    $region4: #{tpu_custom_call.1} parent=1 // pred_region
      %s13 = sadd.s32 0, 0
      %s14 = smul.u32 4, %s13
      %p15 = scmp.lt.s32.totalorder %s14, 3
      %s16 = scalar_select %p15, %s14, 3
      %s17 = smul.addr %s16, 8
      %s18 = scalar_lea.vmem %s0, %s17
      %s19 = sadd.s32 0, 0
      %s20 = smul.u32 4, %s19
    $region5: #{tpu_custom_call.1} parent=1 // pred_fallthru
      _
    // Predicated region
    $region6: #{tpu_custom_call.1} parent=1 // pred_check
      _
    $region7: #{tpu_custom_call.1} parent=1 // pred_check_branch
      %22 = sbr.rel (0) target = $region9
    $region8: #{tpu_custom_call.1} parent=1 // pred_region
      _
    $region9: #{tpu_custom_call.1} parent=1 // pred_fallthru
      _
    %s23 = sadd.s32 0, 0
    %s24 = smul.u32 4, %s23
    %p25 = scmp.lt.s32.totalorder %s24, 3
    %s26 = scalar_select %p25, %s24, 3
    %s27 = smul.addr %s26, 8
    %s28 = scalar_lea.vmem %s0, %s27
    %s29 = sadd.s32 0, 0
    %s30 = smul.u32 4, %s29
    %p31 = scmp.lt.s32.totalorder %s30, 3
    %s32 = scalar_select %p31, %s30, 3
    %s33 = smul.addr %s32, 8
    %s34 = scalar_lea.vmem %s0, %s33
    %s35 = sadd.s32 0, 0
    %s36 = smul.u32 4, %s35
    %p38 = scmp.eq.s32.totalorder 0, 0
    // Predicated region
    $region10: #{tpu_custom_call.1} parent=1 // pred_check
      %p39 = pneg %p38
    $region11: #{tpu_custom_call.1} parent=1 // pred_check_branch
      %41 = sbr.rel (%p39) target = $region13
    $region12: #{tpu_custom_call.1} parent=1 // pred_region
      %42 = vst [vmem:[#allocation2] sm:$0x1] 0.0
      %43 = vst [vmem:[#allocation4] sm:$0x1] 0.0
    $region13: #{tpu_custom_call.1} parent=1 // pred_fallthru
      _
    %v44 = vld [vmem:[%s34] sm:$0xff]
    %v45 = vld [vmem:[%s34 + $0x8] sm:$0xff]
    %v46 = vld [vmem:[%s34 + $0x10] sm:$0xff]
    %v47 = vld [vmem:[%s34 + $0x18] sm:$0xff]
    %vm52 = vcmask 1040384
    %v53 = vrot.slane %v44, 7
    %v54 = vrot.slane %v45, 7
    %v55 = vsel %vm52, %v53, %v54
    %v56 = vrot.slane %v46, 7
    %v57 = vsel %vm52, %v54, %v56
    %v58 = vrot.slane %v47, 7
    %v59 = vsel %vm52, %v56, %v58
    %v64 = vsel %vm52, 0.0, %v53
    %vm65 = vcmask 1046528
    %v66 = vrot.slane %v44, 1
    %v67 = vrot.slane %v45, 1
    %v68 = vsel %vm65, %v66, %v67
    %v69 = vrot.slane %v46, 1
    %v70 = vsel %vm65, %v67, %v69
    %v71 = vrot.slane %v47, 1
    %v72 = vsel %vm65, %v69, %v71
    %v77 = vsel %vm65, %v71, 0.0
    %v78 = vlaneseq
    %v79 = vshrl.u32 %v78, 7
    %v80 = vadd.s32 %v79, 8
    %v81 = vadd.s32 %v79, 16
    %v82 = vadd.s32 %v79, 24
    %vm83 = vcmp.lt.s32.totalorder %v79, 0
    %v84 = vsub.s32 0, %v79
    %v85 = vsel %vm83, %v84, %v79
    %v86 = vshrl.u32 %v85, 4
    %v87 = vand.u32 %v85, 15
    %v88 = vsub.s32 0, %v87
    %v89 = vsel %vm83, %v88, %v87
    %vm90 = vcmp.lt.s32.totalorder %v80, 0
    %v91 = vsub.s32 0, %v80
    %v92 = vsel %vm90, %v91, %v80
    %v93 = vshrl.u32 %v92, 4
    %v94 = vand.u32 %v92, 15
    %v95 = vsub.s32 0, %v94
    %v96 = vsel %vm90, %v95, %v94
    %vm97 = vcmp.lt.s32.totalorder %v81, 0
    %v98 = vsub.s32 0, %v81
    %v99 = vsel %vm97, %v98, %v81
    %v100 = vshrl.u32 %v99, 4
    %v101 = vand.u32 %v99, 15
    %v102 = vsub.s32 0, %v101
    %v103 = vsel %vm97, %v102, %v101
    %vm104 = vcmp.lt.s32.totalorder %v82, 0
    %v105 = vsub.s32 0, %v82
    %v106 = vsel %vm104, %v105, %v82
    %v107 = vshrl.u32 %v106, 4
    %v108 = vand.u32 %v106, 15
    %v109 = vsub.s32 0, %v108
    %v110 = vsel %vm104, %v109, %v108
    %vm111 = vcmp.ne.s32.totalorder %v89, 0
    %vm112 = vcmp.ne.s32.totalorder %v96, 0
    %vm113 = vcmp.ne.s32.totalorder %v103, 0
    %vm114 = vcmp.ne.s32.totalorder %v110, 0
    %vm115 = vcmp.lt.s32.totalorder %v89, 0
    %vm116 = vcmp.lt.s32.totalorder %v96, 0
    %vm117 = vcmp.lt.s32.totalorder %v103, 0
    %vm118 = vcmp.lt.s32.totalorder %v110, 0
    %vm119 = vmand %vm115, %vm111
    %vm120 = vmand %vm116, %vm112
    %vm121 = vmand %vm117, %vm113
    %vm122 = vmand %vm118, %vm114
    %v123 = vadd.s32 %v89, 16
    %v124 = vadd.s32 %v96, 16
    %v125 = vadd.s32 %v103, 16
    %v126 = vadd.s32 %v110, 16
    %v127 = vsel %vm119, %v123, %v89
    %v128 = vsel %vm120, %v124, %v96
    %v129 = vsel %vm121, %v125, %v103
    %v130 = vsel %vm122, %v126, %v110
    %vm131 = vcmp.ge.s32.totalorder %v127, 1
    %vm132 = vcmp.ge.s32.totalorder %v128, 1
    %vm133 = vcmp.ge.s32.totalorder %v129, 1
    %vm134 = vcmp.ge.s32.totalorder %v130, 1
    %v135 = vsel %vm131, 1, 0
    %v136 = vsel %vm132, 1, 0
    %v137 = vsel %vm133, 1, 0
    %v138 = vsel %vm134, 1, 0
    %vm139 = vcmp.eq.s32.totalorder %v135, 1
    %vm140 = vcmp.eq.s32.totalorder %v136, 1
    %vm141 = vcmp.eq.s32.totalorder %v137, 1
    %vm142 = vcmp.eq.s32.totalorder %v138, 1
    %v143 = vsel %vm139, %v64, 0.0
    %v144 = vsel %vm140, %v55, 0.0
    %v145 = vsel %vm141, %v57, 0.0
    %v146 = vsel %vm142, %v59, 0.0
    %vm147 = vcmp.le.s32.totalorder %v127, 14
    %vm148 = vcmp.le.s32.totalorder %v128, 14
    %vm149 = vcmp.le.s32.totalorder %v129, 14
    %vm150 = vcmp.le.s32.totalorder %v130, 14
    %v151 = vsel %vm147, 1, 0
    %v152 = vsel %vm148, 1, 0
    %v153 = vsel %vm149, 1, 0
    %v154 = vsel %vm150, 1, 0
    %vm155 = vcmp.eq.s32.totalorder %v151, 1
    %vm156 = vcmp.eq.s32.totalorder %v152, 1
    %vm157 = vcmp.eq.s32.totalorder %v153, 1
    %vm158 = vcmp.eq.s32.totalorder %v154, 1
    %v159 = vsel %vm155, %v68, 0.0
    %v160 = vsel %vm156, %v70, 0.0
    %v161 = vsel %vm157, %v72, 0.0
    %v162 = vsel %vm158, %v77, 0.0
    %v163 = vpack.c.bf16 %v144, %v143
    %v164 = vpack.c.bf16 %v146, %v145
    %v165 = vld [vmem:[%s1] sm:$0x3]
    %v166 = vpack.c.bf16 %v45, %v44
    %v167 = vpack.c.bf16 %v47, %v46
    %v168 = vld [vmem:[%s1] sm:$0xc]
    %v170 = vunpack.c.l.b16 %v168
    %v171 = vpack.c.b16 %v170, %v170
    %v172 = vrot.slane %v171, 2
    %vm173 = vcmask 31744
    %v175 = vsel %vm173, %v166, 0
    %v178 = vsel %vm173, %v167, 0
    %vm180 = vcmask 1041408
    %v182 = vsel %vm180, %v172, 0
    %184 = vmatprep.subr.bf16.mxu0 0
    %185 = vmatpush1.bf16.msra.mxu0 0
    %186 = vmatprep.subr.bf16.mxu0 0
    %187 = vmatpush1.bf16.msra.mxu0 0
    %188 = vmatprep.subr.bf16.mxu0 0
    %189 = vmatpush1.bf16.msra.mxu0 0
    %190 = vmatprep.subr.bf16.mxu0 0
    %191 = vmatpush1.bf16.msra.mxu0 0
    %192 = vmatprep.subr.bf16.mxu0 0
    %193 = vmatpush1.bf16.msra.mxu0 0
    %194 = vmatprep.subr.bf16.mxu0 0
    %195 = vmatpush1.bf16.msra.mxu0 0
    %196 = vmatprep.subr.bf16.mxu0 0
    %197 = vmatpush1.bf16.msra.mxu0 0
    %198 = vmatprep.subr.bf16.mxu0 0
    %199 = vmatpush1.bf16.msra.mxu0 %v182
    %200 = vmatprep.subr.bf16.mxu0 0
    %201 = vmatpush2.bf16.msra.mxu0 0
    %202 = vmatprep.subr.bf16.mxu0 0
    %203 = vmatpush2.bf16.msra.mxu0 0
    %204 = vmatprep.subr.bf16.mxu0 0
    %205 = vmatpush2.bf16.msra.mxu0 0
    %206 = vmatprep.subr.bf16.mxu0 0
    %207 = vmatpush2.bf16.msra.mxu0 0
    %208 = vmatprep.subr.bf16.mxu0 0
    %209 = vmatpush2.bf16.msra.mxu0 0
    %210 = vmatprep.subr.bf16.mxu0 0
    %211 = vmatpush2.bf16.msra.mxu0 0
    %212 = vmatprep.subr.bf16.mxu0 0
    %213 = vmatpush2.bf16.msra.mxu0 0
    %214 = vmatprep.subr.bf16.mxu0 0
    %215 = vmatpush2.bf16.msra.mxu0 0
    %216 = vmatprep.mubr.bf16.mxu0 0
    %217 = vmatmul.mubr.bf16.gmra.mxu0 %v175
    %v218 = vpop.f32.mrf.mxu0
    %v219 = vadd.f32 0.0, %v218
    %v220 = vpop.f32.mrf.mxu0
    %v221 = vpop.f32.mrf.mxu0
    %v222 = vadd.f32 0.0, %v221
    %v223 = vpop.f32.mrf.mxu0
    %224 = vmatprep.mubr.bf16.mxu0 0
    %225 = vmatmul.mubr.bf16.gmra.mxu0 %v178
    %v226 = vpop.f32.mrf.mxu0
    %v227 = vadd.f32 0.0, %v226
    %v228 = vpop.f32.mrf.mxu0
    %v229 = vpop.f32.mrf.mxu0
    %v230 = vadd.f32 0.0, %v229
    %v231 = vpop.f32.mrf.mxu0
    %232 = vdwg.mxu0
    %v234 = vsel %vm173, %v163, 0
    %v237 = vsel %vm173, %v164, 0
    %v240 = vsel %vm180, %v165, 0
    %242 = vmatprep.subr.bf16.mxu0 0
    %243 = vmatpush1.bf16.msra.mxu0 0
    %244 = vmatprep.subr.bf16.mxu0 0
    %245 = vmatpush1.bf16.msra.mxu0 0
    %246 = vmatprep.subr.bf16.mxu0 0
    %247 = vmatpush1.bf16.msra.mxu0 0
    %248 = vmatprep.subr.bf16.mxu0 0
    %249 = vmatpush1.bf16.msra.mxu0 0
    %250 = vmatprep.subr.bf16.mxu0 0
    %251 = vmatpush1.bf16.msra.mxu0 0
    %252 = vmatprep.subr.bf16.mxu0 0
    %253 = vmatpush1.bf16.msra.mxu0 0
    %254 = vmatprep.subr.bf16.mxu0 0
    %255 = vmatpush1.bf16.msra.mxu0 0
    %256 = vmatprep.subr.bf16.mxu0 0
    %257 = vmatpush1.bf16.msra.mxu0 %v240
    %258 = vmatprep.subr.bf16.mxu0 0
    %259 = vmatpush2.bf16.msra.mxu0 0
    %260 = vmatprep.subr.bf16.mxu0 0
    %261 = vmatpush2.bf16.msra.mxu0 0
    %262 = vmatprep.subr.bf16.mxu0 0
    %263 = vmatpush2.bf16.msra.mxu0 0
    %264 = vmatprep.subr.bf16.mxu0 0
    %265 = vmatpush2.bf16.msra.mxu0 0
    %266 = vmatprep.subr.bf16.mxu0 0
    %267 = vmatpush2.bf16.msra.mxu0 0
    %268 = vmatprep.subr.bf16.mxu0 0
    %269 = vmatpush2.bf16.msra.mxu0 0
    %270 = vmatprep.subr.bf16.mxu0 0
    %271 = vmatpush2.bf16.msra.mxu0 0
    %272 = vmatprep.subr.bf16.mxu0 0
    %273 = vmatpush2.bf16.msra.mxu0 0
    %274 = vmatprep.mubr.bf16.mxu0 0
    %275 = vmatmul.mubr.bf16.gmra.mxu0 %v234
    %v276 = vpop.f32.mrf.mxu0
    %v277 = vadd.f32 %v219, %v276
    %v278 = vpop.f32.mrf.mxu0
    %v279 = vpop.f32.mrf.mxu0
    %v280 = vadd.f32 %v222, %v279
    %v281 = vpop.f32.mrf.mxu0
    %282 = vmatprep.mubr.bf16.mxu0 0
    %283 = vmatmul.mubr.bf16.gmra.mxu0 %v237
    %v284 = vpop.f32.mrf.mxu0
    %v285 = vadd.f32 %v227, %v284
    %v286 = vpop.f32.mrf.mxu0
    %v287 = vpop.f32.mrf.mxu0
    %v288 = vadd.f32 %v230, %v287
    %v289 = vpop.f32.mrf.mxu0
    %290 = vdwg.mxu0
    %v291 = vpack.c.bf16 %v160, %v159
    %v292 = vpack.c.bf16 %v162, %v161
    %v293 = vld [vmem:[%s1 + $0x4] sm:$0x3]
    %v295 = vsel %vm173, %v291, 0
    %v298 = vsel %vm173, %v292, 0
    %v301 = vsel %vm180, %v293, 0
    %303 = vmatprep.subr.bf16.mxu0 0
    %304 = vmatpush1.bf16.msra.mxu0 0
    %305 = vmatprep.subr.bf16.mxu0 0
    %306 = vmatpush1.bf16.msra.mxu0 0
    %307 = vmatprep.subr.bf16.mxu0 0
    %308 = vmatpush1.bf16.msra.mxu0 0
    %309 = vmatprep.subr.bf16.mxu0 0
    %310 = vmatpush1.bf16.msra.mxu0 0
    %311 = vmatprep.subr.bf16.mxu0 0
    %312 = vmatpush1.bf16.msra.mxu0 0
    %313 = vmatprep.subr.bf16.mxu0 0
    %314 = vmatpush1.bf16.msra.mxu0 0
    %315 = vmatprep.subr.bf16.mxu0 0
    %316 = vmatpush1.bf16.msra.mxu0 0
    %317 = vmatprep.subr.bf16.mxu0 0
    %318 = vmatpush1.bf16.msra.mxu0 %v301
    %319 = vmatprep.subr.bf16.mxu0 0
    %320 = vmatpush2.bf16.msra.mxu0 0
    %321 = vmatprep.subr.bf16.mxu0 0
    %322 = vmatpush2.bf16.msra.mxu0 0
    %323 = vmatprep.subr.bf16.mxu0 0
    %324 = vmatpush2.bf16.msra.mxu0 0
    %325 = vmatprep.subr.bf16.mxu0 0
    %326 = vmatpush2.bf16.msra.mxu0 0
    %327 = vmatprep.subr.bf16.mxu0 0
    %328 = vmatpush2.bf16.msra.mxu0 0
    %329 = vmatprep.subr.bf16.mxu0 0
    %330 = vmatpush2.bf16.msra.mxu0 0
    %331 = vmatprep.subr.bf16.mxu0 0
    %332 = vmatpush2.bf16.msra.mxu0 0
    %333 = vmatprep.subr.bf16.mxu0 0
    %334 = vmatpush2.bf16.msra.mxu0 0
    %335 = vmatprep.mubr.bf16.mxu0 0
    %336 = vmatmul.mubr.bf16.gmra.mxu0 %v295
    %v337 = vpop.f32.mrf.mxu0
    %v338 = vadd.f32 0.0, %v337
    %v339 = vpop.f32.mrf.mxu0
    %v340 = vpop.f32.mrf.mxu0
    %v341 = vadd.f32 0.0, %v340
    %v342 = vpop.f32.mrf.mxu0
    %343 = vmatprep.mubr.bf16.mxu0 0
    %344 = vmatmul.mubr.bf16.gmra.mxu0 %v298
    %v345 = vpop.f32.mrf.mxu0
    %v346 = vadd.f32 0.0, %v345
    %v347 = vpop.f32.mrf.mxu0
    %v348 = vpop.f32.mrf.mxu0
    %v349 = vadd.f32 0.0, %v348
    %v350 = vpop.f32.mrf.mxu0
    %351 = vdwg.mxu0
    %v352 = vadd.f32 %v277, %v338
    %v353 = vadd.f32 %v280, %v341
    %v354 = vadd.f32 %v285, %v346
    %v355 = vadd.f32 %v288, %v349
    %v356 = vld [vmem:[#allocation2] sm:$0x1]
    %v357 = vadd.f32 %v352, %v353
    %v358 = vadd.f32 %v357, %v354
    %v359 = vadd.f32 %v358, %v355
    %v360 = vrot.slane %v359, 4
    %v361 = vadd.f32 %v359, %v360
    %v362 = vrot.slane %v361, 2
    %v363 = vadd.f32 %v361, %v362
    %v364 = vrot.slane %v363, 1
    %v365 = vadd.f32 %v363, %v364
    %v366 = vadd.f32 %v356, %v365
    %367 = vst [vmem:[#allocation2] sm:$0x1] %v366
    %v368 = vld [vmem:[#allocation4] sm:$0x1]
    %v369 = vmul.f32 %v352, %v352
    %v370 = vmul.f32 %v353, %v353
    %v371 = vmul.f32 %v354, %v354
    %v372 = vmul.f32 %v355, %v355
    %v373 = vadd.f32 %v369, %v370
    %v374 = vadd.f32 %v373, %v371
    %v375 = vadd.f32 %v374, %v372
    %v376 = vrot.slane %v375, 4
    %v377 = vadd.f32 %v375, %v376
    %v378 = vrot.slane %v377, 2
    %v379 = vadd.f32 %v377, %v378
    %v380 = vrot.slane %v379, 1
    %v381 = vadd.f32 %v379, %v380
    %v382 = vadd.f32 %v368, %v381
    %383 = vst [vmem:[#allocation4] sm:$0x1] %v382
    // Predicated region
    $region14: #{tpu_custom_call.1} parent=1 // pred_check
      _
    $region15: #{tpu_custom_call.1} parent=1 // pred_check_branch
      %385 = sbr.rel (0) target = $region17
    $region16: #{tpu_custom_call.1} parent=1 // pred_region
      %s387 = ssub.s32 16, 16
      %388 = vsyncadd [#allocation3], %s387
      %s390 = sshll.u32 [#allocation2], 4
      %s391 = int_to_ptr.vmem [resolvable:$true] %s390
      %393 = dma.vmem_to_hbm [thread:$0]  %s391, 16, %s2, [#allocation3]
    $region17: #{tpu_custom_call.1} parent=1 // pred_fallthru
      _
    // Predicated region
    $region18: #{tpu_custom_call.1} parent=1 // pred_check
      _
    $region19: #{tpu_custom_call.1} parent=1 // pred_check_branch
      %395 = sbr.rel (0) target = $region21
    $region20: #{tpu_custom_call.1} parent=1 // pred_region
      %s397 = ssub.s32 16, 16
      %398 = vsyncadd [#allocation5], %s397
      %s400 = sshll.u32 [#allocation4], 4
      %s401 = int_to_ptr.vmem [resolvable:$true] %s400
      %403 = dma.vmem_to_hbm [thread:$0]  %s401, 16, %s3, [#allocation5]
    $region21: #{tpu_custom_call.1} parent=1 // pred_fallthru
      _
    // Predicated region
    $region22: #{tpu_custom_call.1} parent=1 // pred_check
      _
    $region23: #{tpu_custom_call.1} parent=1 // pred_check_branch
      %405 = sbr.rel (0) target = $region25
    $region24: #{tpu_custom_call.1} parent=1 // pred_region
      %406 = dma.done [#allocation3], 16
    $region25: #{tpu_custom_call.1} parent=1 // pred_fallthru
      _
    // Predicated region
    $region26: #{tpu_custom_call.1} parent=1 // pred_check
      _
    $region27: #{tpu_custom_call.1} parent=1 // pred_check_branch
      %408 = sbr.rel (0) target = $region29
    $region28: #{tpu_custom_call.1} parent=1 // pred_region
      %409 = dma.done [#allocation5], 16
    $region29: #{tpu_custom_call.1} parent=1 // pred_fallthru
      _
    %410 = vsyncpa [#allocation3], 1
    %411 = vsyncpa [#allocation5], 1

</llo_original>
